<compile_context>
chip_gen: v7x
topology: tpu7x:2x2x1
jax: 0.10.0
libtpu: 0.0.40
codegen_flags: <defaults>
</compile_context>

<pallas_src>
import jax
import jax.numpy as jnp
from jax.experimental import pallas as pl
from jax.experimental.pallas import tpu as pltpu


F_IN = 310
HID = 128
HEAD = 64
N_CLASS = 3
N_DOMAIN = 2
OUT_PAD = 128          # lane-dense combined output width
ALIGN = 16             # bf16 sublane packing: keep batch tiles multiple of 16


def _round_up(x, m):
    return (x + m - 1) // m * m


def dann_kernel(x_ref,
                w1, b1,                       # feature extractor layer 1
                wh1, bh1, wh2, bh2, wh3, bh3, # fused (w2 * heads) stack
                out_ref):
    """One batch tile: (TB, 310) bf16 -> (TB, 128) bf16 combined logits.

    Gradient reversal is identity in the forward pass, so both heads consume
    the same features; the two heads run fused as 128-wide matmuls
    (block-diagonal weights) so every MXU push is full-width.  The second
    feature-extractor Linear has been pre-multiplied into wh1/bh1 offline.
    """
    x = x_ref[...]                                               # bf16

    # Linear(310->128) + ReLU
    h = jnp.dot(x, w1[...], preferred_element_type=jnp.float32) + b1[...]
    h = jnp.maximum(h, 0.0)

    # (fused) Linear(128->128) . Linear(128->2*64) + ReLU
    t = jnp.dot(h.astype(jnp.bfloat16), wh1[...],
                preferred_element_type=jnp.float32) + bh1[...]
    t = jnp.maximum(t, 0.0)

    # block-diagonal Linear(2*64 -> 2*64) + ReLU
    t = jnp.dot(t.astype(jnp.bfloat16), wh2[...],
                preferred_element_type=jnp.float32) + bh2[...]
    t = jnp.maximum(t, 0.0)

    # final block-diagonal projection: lanes 0:3 class logits, 3:5 domain logits
    out = jnp.dot(t.astype(jnp.bfloat16), wh3[...],
                  preferred_element_type=jnp.float32) + bh3[...]
    out_ref[...] = out.astype(out_ref.dtype)


def init_linear(key, fan_in, fan_out):
    """PyTorch-style default nn.Linear init: U(-1/sqrt(fan_in), 1/sqrt(fan_in))."""
    kw, kb = jax.random.split(key)
    bound = 1.0 / jnp.sqrt(jnp.float32(fan_in))
    w = jax.random.uniform(kw, (fan_in, fan_out), jnp.float32, -bound, bound)
    b = jax.random.uniform(kb, (1, fan_out), jnp.float32, -bound, bound)
    return w, b


def make_raw_params(key):
    """Per-layer (w, b) in PyTorch architecture order, (in, out) layout, f32."""
    dims = [
        (F_IN, HID), (HID, HID),                      # feature extractor
        (HID, HEAD), (HEAD, HEAD), (HEAD, N_CLASS),   # label predictor
        (HID, HEAD), (HEAD, HEAD), (HEAD, N_DOMAIN),  # domain predictor
    ]
    keys = jax.random.split(key, len(dims))
    return tuple(init_linear(k, fi, fo) for k, (fi, fo) in zip(keys, dims))


def pack_params(raw):
    """One-time packing: fuse the heads, pre-multiply w2 into the first head
    layer (all in f32), then cast weights to bf16 (biases stay f32)."""
    ((w1, b1), (w2, b2),
     (wl1, bl1), (wl2, bl2), (wl3, bl3),
     (wd1, bd1), (wd2, bd2), (wd3, bd3)) = raw

    bf16 = jnp.bfloat16

    # head layer 1: horizontal concat (both heads read the same features,
    # since gradient reversal is identity in the forward pass)
    wh1_raw = jnp.concatenate([wl1, wd1], axis=1)                 # (128, 128)
    bh1_raw = jnp.concatenate([bl1, bd1], axis=1)                 # (1, 128)

    # fuse the second feature-extractor Linear (no nonlinearity in between):
    #   feat @ Wh1 + bh1 = (h @ W2 + b2) @ Wh1 + bh1
    #                    = h @ (W2 @ Wh1) + (b2 @ Wh1 + bh1)
    wh1 = w2 @ wh1_raw                                            # (128, 128)
    bh1 = b2 @ wh1_raw + bh1_raw                                  # (1, 128)

    # head layer 2: block-diagonal so the two heads stay independent
    wh2 = jnp.zeros((2 * HEAD, 2 * HEAD), jnp.float32)
    wh2 = wh2.at[:HEAD, :HEAD].set(wl2).at[HEAD:, HEAD:].set(wd2)
    bh2 = jnp.concatenate([bl2, bd2], axis=1)                     # (1, 128)

    # head layer 3: block-diagonal, lane-padded to 128 for a dense output slab
    wh3 = jnp.zeros((2 * HEAD, OUT_PAD), jnp.float32)
    wh3 = wh3.at[:HEAD, :N_CLASS].set(wl3)
    wh3 = wh3.at[HEAD:, N_CLASS:N_CLASS + N_DOMAIN].set(wd3)
    bh3 = jnp.zeros((1, OUT_PAD), jnp.float32)
    bh3 = bh3.at[:, :N_CLASS].set(bl3)
    bh3 = bh3.at[:, N_CLASS:N_CLASS + N_DOMAIN].set(bd3)

    return (w1.astype(bf16), b1,
            wh1.astype(bf16), bh1,
            wh2.astype(bf16), bh2,
            wh3.astype(bf16), bh3)


def dann_forward(x, _lambda, packed, *, tb=2048):
    """Forward pass. `_lambda` only matters for ReverseLayerF's backward."""
    del _lambda  # identity in the forward pass
    B = x.shape[0]

    # Adaptive batch tiling:
    #   * tiles are multiples of 16 rows (bf16 sublane packing),
    #   * padding waste is bounded (< 16 rows per tile),
    #   * when the batch would fit a single tile but has >= 32 rows, split it
    #     into 2 tiles so ("parallel",) can shard across both v7x TensorCores.
    B_a = _round_up(max(B, 1), ALIGN)
    n_tiles = max(1, pl.cdiv(B_a, tb))
    if n_tiles == 1 and B_a >= 2 * ALIGN:
        n_tiles = 2
    TB = _round_up(pl.cdiv(B_a, n_tiles), ALIGN)
    B_pad = n_tiles * TB

    # single cheap bf16 cast; minimal row padding only when required,
    # feature dim stays at 310 (no padded-384 copy in HBM)
    xb = x.astype(jnp.bfloat16)
    if B_pad != B:
        xb = jnp.pad(xb, ((0, B_pad - B), (0, 0)))

    const_map = lambda i: (0, 0)
    weight_specs = [pl.BlockSpec(p.shape, const_map) for p in packed]

    out = pl.pallas_call(
        dann_kernel,
        out_shape=jax.ShapeDtypeStruct((B_pad, OUT_PAD), jnp.bfloat16),
        grid=(n_tiles,),
        in_specs=[pl.BlockSpec((TB, F_IN), lambda i: (i, 0))] + weight_specs,
        out_specs=pl.BlockSpec((TB, OUT_PAD), lambda i: (i, 0)),
        compiler_params=pltpu.CompilerParams(
            dimension_semantics=("parallel",)),   # megacore on v7x
    )(xb, *packed)

    class_out = out[:B, :N_CLASS].astype(jnp.float32)
    domain_out = out[:B, N_CLASS:N_CLASS + N_DOMAIN].astype(jnp.float32)
    return class_out, domain_out


def dann_forward_ref(x, raw):
    """Pure-JAX reference: original unfused architecture, f32 activations,
    using the same bf16-quantized weights the kernel consumes."""
    q = lambda w: w.astype(jnp.bfloat16).astype(jnp.float32)
    ((w1, b1), (w2, b2),
     (wl1, bl1), (wl2, bl2), (wl3, bl3),
     (wd1, bd1), (wd2, bd2), (wd3, bd3)) = raw
    h = jnp.maximum(x @ q(w1) + b1, 0.0)
    feat = h @ q(w2) + b2
    c = jnp.maximum(feat @ q(wl1) + bl1, 0.0)
    c = jnp.maximum(c @ q(wl2) + bl2, 0.0)
    class_out = c @ q(wl3) + bl3
    d = jnp.maximum(feat @ q(wd1) + bd1, 0.0)
    d = jnp.maximum(d @ q(wd2) + bd2, 0.0)
    domain_out = d @ q(wd3) + bd3
    return class_out, domain_out


if __name__ == "__main__":
    key = jax.random.PRNGKey(0)
    kx, kp = jax.random.split(key)

    B = 8
    x = jax.random.normal(kx, (B, F_IN), jnp.float32)
    _lambda = 0.5

    raw = make_raw_params(kp)
    packed = pack_params(raw)

    class_out, domain_out = dann_forward(x, _lambda, packed)
    jax.block_until_ready((class_out, domain_out))

    # sanity-check against the pure-JAX (unfused, f32-activation) reference;
    # bf16 input/activation/output casts in the kernel -> loosened tolerance.
    ref_c, ref_d = dann_forward_ref(x, raw)
    assert class_out.shape == (B, N_CLASS) and domain_out.shape == (B, N_DOMAIN)
    assert jnp.allclose(class_out, ref_c, atol=3e-2, rtol=3e-2), \
        float(jnp.max(jnp.abs(class_out - ref_c)))
    assert jnp.allclose(domain_out, ref_d, atol=3e-2, rtol=3e-2), \
        float(jnp.max(jnp.abs(domain_out - ref_d)))

    print("KERNEL_OK")
</pallas_src>

<mosaic_0001>
module attributes {stable_mosaic.version = 11 : i64} {
  func.func @dann_kernel(%arg0: i32, %arg1: memref<16x310xbf16, #tpu.memory_space<vmem>>, %arg2: memref<310x128xbf16, #tpu.memory_space<vmem>>, %arg3: memref<1x128xf32, #tpu.memory_space<vmem>>, %arg4: memref<128x128xbf16, #tpu.memory_space<vmem>>, %arg5: memref<1x128xf32, #tpu.memory_space<vmem>>, %arg6: memref<128x128xbf16, #tpu.memory_space<vmem>>, %arg7: memref<1x128xf32, #tpu.memory_space<vmem>>, %arg8: memref<128x128xbf16, #tpu.memory_space<vmem>>, %arg9: memref<1x128xf32, #tpu.memory_space<vmem>>, %arg10: memref<16x128xbf16, #tpu.memory_space<vmem>>) attributes {dimension_semantics = [#tpu.dimension_semantics<parallel>], iteration_bounds = array<i64: 1>, scalar_prefetch = 0 : i64, scratch_operands = 0 : i64, tpu.core_type = #tpu.core_type<tc>, window_params = [{transform_indices = @transform_0, window_bounds = array<i64: 16, 310>}, {pipeline_mode = #tpu.pipeline_mode<synchronous>, transform_indices = @transform_1, window_bounds = array<i64: 310, 128>}, {pipeline_mode = #tpu.pipeline_mode<synchronous>, transform_indices = @transform_2, window_bounds = array<i64: 1, 128>}, {pipeline_mode = #tpu.pipeline_mode<synchronous>, transform_indices = @transform_3, window_bounds = array<i64: 128, 128>}, {pipeline_mode = #tpu.pipeline_mode<synchronous>, transform_indices = @transform_4, window_bounds = array<i64: 1, 128>}, {pipeline_mode = #tpu.pipeline_mode<synchronous>, transform_indices = @transform_5, window_bounds = array<i64: 128, 128>}, {pipeline_mode = #tpu.pipeline_mode<synchronous>, transform_indices = @transform_6, window_bounds = array<i64: 1, 128>}, {pipeline_mode = #tpu.pipeline_mode<synchronous>, transform_indices = @transform_7, window_bounds = array<i64: 128, 128>}, {pipeline_mode = #tpu.pipeline_mode<synchronous>, transform_indices = @transform_8, window_bounds = array<i64: 1, 128>}, {transform_indices = @transform_9, window_bounds = array<i64: 16, 128>}]} {
    %c0 = arith.constant 0 : index
    %c0_0 = arith.constant 0 : index
    %0 = vector.load %arg1[%c0, %c0_0] : memref<16x310xbf16, #tpu.memory_space<vmem>>, vector<16x310xbf16>
    %c0_1 = arith.constant 0 : index
    %c0_2 = arith.constant 0 : index
    %1 = vector.load %arg2[%c0_1, %c0_2] : memref<310x128xbf16, #tpu.memory_space<vmem>>, vector<310x128xbf16>
    %cst = arith.constant dense<0.000000e+00> : vector<16x128xf32>
    %2 = tpu.matmul %0, %1, %cst {dimension_numbers = #tpu.dot_dimension_numbers<[1], [0], [0], [1], [0, 0, 1, 1], [], []>} : vector<16x310xbf16>, vector<310x128xbf16>, vector<16x128xf32> -> vector<16x128xf32>
    %c0_3 = arith.constant 0 : index
    %c0_4 = arith.constant 0 : index
    %3 = vector.load %arg3[%c0_3, %c0_4] : memref<1x128xf32, #tpu.memory_space<vmem>>, vector<1x128xf32>
    %4 = vector.broadcast %3 : vector<1x128xf32> to vector<16x128xf32>
    %5 = arith.addf %2, %4 : vector<16x128xf32>
    %cst_5 = arith.constant 0.000000e+00 : f32
    %6 = vector.broadcast %cst_5 : f32 to vector<16x128xf32>
    %7 = arith.maximumf %5, %6 : vector<16x128xf32>
    %8 = arith.truncf %7 : vector<16x128xf32> to vector<16x128xbf16>
    %c0_6 = arith.constant 0 : index
    %c0_7 = arith.constant 0 : index
    %9 = vector.load %arg4[%c0_6, %c0_7] : memref<128x128xbf16, #tpu.memory_space<vmem>>, vector<128x128xbf16>
    %cst_8 = arith.constant dense<0.000000e+00> : vector<16x128xf32>
    %10 = tpu.matmul %8, %9, %cst_8 {dimension_numbers = #tpu.dot_dimension_numbers<[1], [0], [0], [1], [0, 0, 1, 1], [], []>} : vector<16x128xbf16>, vector<128x128xbf16>, vector<16x128xf32> -> vector<16x128xf32>
    %c0_9 = arith.constant 0 : index
    %c0_10 = arith.constant 0 : index
    %11 = vector.load %arg5[%c0_9, %c0_10] : memref<1x128xf32, #tpu.memory_space<vmem>>, vector<1x128xf32>
    %12 = vector.broadcast %11 : vector<1x128xf32> to vector<16x128xf32>
    %13 = arith.addf %10, %12 : vector<16x128xf32>
    %cst_11 = arith.constant 0.000000e+00 : f32
    %14 = vector.broadcast %cst_11 : f32 to vector<16x128xf32>
    %15 = arith.maximumf %13, %14 : vector<16x128xf32>
    %16 = arith.truncf %15 : vector<16x128xf32> to vector<16x128xbf16>
    %c0_12 = arith.constant 0 : index
    %c0_13 = arith.constant 0 : index
    %17 = vector.load %arg6[%c0_12, %c0_13] : memref<128x128xbf16, #tpu.memory_space<vmem>>, vector<128x128xbf16>
    %cst_14 = arith.constant dense<0.000000e+00> : vector<16x128xf32>
    %18 = tpu.matmul %16, %17, %cst_14 {dimension_numbers = #tpu.dot_dimension_numbers<[1], [0], [0], [1], [0, 0, 1, 1], [], []>} : vector<16x128xbf16>, vector<128x128xbf16>, vector<16x128xf32> -> vector<16x128xf32>
    %c0_15 = arith.constant 0 : index
    %c0_16 = arith.constant 0 : index
    %19 = vector.load %arg7[%c0_15, %c0_16] : memref<1x128xf32, #tpu.memory_space<vmem>>, vector<1x128xf32>
    %20 = vector.broadcast %19 : vector<1x128xf32> to vector<16x128xf32>
    %21 = arith.addf %18, %20 : vector<16x128xf32>
    %cst_17 = arith.constant 0.000000e+00 : f32
    %22 = vector.broadcast %cst_17 : f32 to vector<16x128xf32>
    %23 = arith.maximumf %21, %22 : vector<16x128xf32>
    %24 = arith.truncf %23 : vector<16x128xf32> to vector<16x128xbf16>
    %c0_18 = arith.constant 0 : index
    %c0_19 = arith.constant 0 : index
    %25 = vector.load %arg8[%c0_18, %c0_19] : memref<128x128xbf16, #tpu.memory_space<vmem>>, vector<128x128xbf16>
    %cst_20 = arith.constant dense<0.000000e+00> : vector<16x128xf32>
    %26 = tpu.matmul %24, %25, %cst_20 {dimension_numbers = #tpu.dot_dimension_numbers<[1], [0], [0], [1], [0, 0, 1, 1], [], []>} : vector<16x128xbf16>, vector<128x128xbf16>, vector<16x128xf32> -> vector<16x128xf32>
    %c0_21 = arith.constant 0 : index
    %c0_22 = arith.constant 0 : index
    %27 = vector.load %arg9[%c0_21, %c0_22] : memref<1x128xf32, #tpu.memory_space<vmem>>, vector<1x128xf32>
    %28 = vector.broadcast %27 : vector<1x128xf32> to vector<16x128xf32>
    %29 = arith.addf %26, %28 : vector<16x128xf32>
    %30 = arith.truncf %29 : vector<16x128xf32> to vector<16x128xbf16>
    %c0_23 = arith.constant 0 : index
    %c0_24 = arith.constant 0 : index
    %31 = vector.load %arg10[%c0_23, %c0_24] : memref<16x128xbf16, #tpu.memory_space<vmem>>, vector<16x128xbf16>
    tpu.vector_store %arg10[%c0_23, %c0_24], %30 {strides = array<i32>} : memref<16x128xbf16, #tpu.memory_space<vmem>>, vector<16x128xbf16>,
    return
  }
  func.func @transform_0(%arg0: i32) -> (i32, i32) {
    %c0_i32 = arith.constant 0 : i32
    %c0_i32_0 = arith.constant 0 : i32
    return %arg0, %c0_i32 : i32, i32
  }
  func.func @transform_1(%arg0: i32) -> (i32, i32) {
    %c0_i32 = arith.constant 0 : i32
    %c0_i32_0 = arith.constant 0 : i32
    %c0_i32_1 = arith.constant 0 : i32
    return %c0_i32, %c0_i32_0 : i32, i32
  }
  func.func @transform_2(%arg0: i32) -> (i32, i32) {
    %c0_i32 = arith.constant 0 : i32
    %c0_i32_0 = arith.constant 0 : i32
    %c0_i32_1 = arith.constant 0 : i32
    return %c0_i32, %c0_i32_0 : i32, i32
  }
  func.func @transform_3(%arg0: i32) -> (i32, i32) {
    %c0_i32 = arith.constant 0 : i32
    %c0_i32_0 = arith.constant 0 : i32
    %c0_i32_1 = arith.constant 0 : i32
    return %c0_i32, %c0_i32_0 : i32, i32
  }
  func.func @transform_4(%arg0: i32) -> (i32, i32) {
    %c0_i32 = arith.constant 0 : i32
    %c0_i32_0 = arith.constant 0 : i32
    %c0_i32_1 = arith.constant 0 : i32
    return %c0_i32, %c0_i32_0 : i32, i32
  }
  func.func @transform_5(%arg0: i32) -> (i32, i32) {
    %c0_i32 = arith.constant 0 : i32
    %c0_i32_0 = arith.constant 0 : i32
    %c0_i32_1 = arith.constant 0 : i32
    return %c0_i32, %c0_i32_0 : i32, i32
  }
  func.func @transform_6(%arg0: i32) -> (i32, i32) {
    %c0_i32 = arith.constant 0 : i32
    %c0_i32_0 = arith.constant 0 : i32
    %c0_i32_1 = arith.constant 0 : i32
    return %c0_i32, %c0_i32_0 : i32, i32
  }
  func.func @transform_7(%arg0: i32) -> (i32, i32) {
    %c0_i32 = arith.constant 0 : i32
    %c0_i32_0 = arith.constant 0 : i32
    %c0_i32_1 = arith.constant 0 : i32
    return %c0_i32, %c0_i32_0 : i32, i32
  }
  func.func @transform_8(%arg0: i32) -> (i32, i32) {
    %c0_i32 = arith.constant 0 : i32
    %c0_i32_0 = arith.constant 0 : i32
    %c0_i32_1 = arith.constant 0 : i32
    return %c0_i32, %c0_i32_0 : i32, i32
  }
  func.func @transform_9(%arg0: i32) -> (i32, i32) {
    %c0_i32 = arith.constant 0 : i32
    %c0_i32_0 = arith.constant 0 : i32
    return %arg0, %c0_i32 : i32, i32
  }
}

</mosaic_0001>

<llo_original>
// kernel: tpu_custom_call.1
$region0: #{tpu_custom_call.1}
  #allocation0 [shape = 'u32[]', space=smem, size = 0x4, offset = 0x4, fixed_abs, tag = 'smem constant byte address 0x4 - core index']
  #allocation1 [shape = 'u32[144,128]{1,0:T(1,128)}', space=vmem, size = 0x12000, scoped, tag = 'internal scratch']
  %s0 = inlined_call_operand.hbm [shape: bf16[16,310], index: 0, kind: input, shape index: {}]
  %s1 = inlined_call_operand.hbm [shape: bf16[310,128], index: 1, kind: input, shape index: {}]
  %s2 = inlined_call_operand.vmem [shape: f32[1,128], index: 2, kind: input, shape index: {}]
  %s3 = inlined_call_operand.hbm [shape: bf16[128,128], index: 3, kind: input, shape index: {}]
  %s4 = inlined_call_operand.vmem [shape: f32[1,128], index: 4, kind: input, shape index: {}]
  %s5 = inlined_call_operand.hbm [shape: bf16[128,128], index: 5, kind: input, shape index: {}]
  %s6 = inlined_call_operand.vmem [shape: f32[1,128], index: 6, kind: input, shape index: {}]
  %s7 = inlined_call_operand.hbm [shape: bf16[128,128], index: 7, kind: input, shape index: {}]
  %s8 = inlined_call_operand.vmem [shape: f32[1,128], index: 8, kind: input, shape index: {}]
  %s9 = inlined_call_operand.hbm [shape: bf16[16,128], index: 9, kind: output, shape index: {}]
  %s10 = sld [smem:[#allocation0]]
  $region66: #{tpu_custom_call.1} parent=0
    _
  %s12 = ssub.s32 1, %s10
  %s13 = scalar_select 0, %s12, %s10
  $region1: #{tpu_custom_call.1} parent=0
    #allocation2 [shape = 'u8[12288]{0}', space=vmem, size = 0x3000, scoped, tag = 'input window, operand 0, single buffered']
    #allocation3 [shape = 's32[1]{0}', space=sflag, size = 0x4, scoped, tag = 'scoped memory for tpu_custom_call.1']
    #allocation4 [shape = 's32[1]{0}', space=sflag, size = 0x4, scoped, tag = 'scoped memory for tpu_custom_call.1']
    #allocation5 [shape = 'u8[79872]{0}', space=vmem, size = 0x13800, scoped, tag = 'input window, operand 1, single buffered']
    #allocation6 [shape = 's32[1]{0}', space=sflag, size = 0x4, scoped, tag = 'scoped memory for tpu_custom_call.1']
    #allocation7 [shape = 'u8[32768]{0}', space=vmem, size = 0x8000, scoped, tag = 'input window, operand 3, single buffered']
    #allocation8 [shape = 'u8[32768]{0}', space=vmem, size = 0x8000, scoped, tag = 'input window, operand 5, single buffered']
    #allocation9 [shape = 's32[1]{0}', space=sflag, size = 0x4, scoped, tag = 'scoped memory for tpu_custom_call.1']
    #allocation10 [shape = 'u8[32768]{0}', space=vmem, size = 0x8000, scoped, tag = 'input window, operand 7, single buffered']
    #allocation11 [shape = 'u8[4096]{0}', space=vmem, size = 0x1000, scoped, tag = 'output window, operand 0, single buffered']
    %14 = vsyncpa [#allocation3], 0
    %15 = vsyncpa [#allocation6], 0
    %16 = vsyncpa [#allocation9], 0
    %17 = vsyncpa [#allocation4], 0
    // Predicated region
    $region2: #{tpu_custom_call.1} parent=1 // pred_check
      _
    $region3: #{tpu_custom_call.1} parent=1 // pred_check_branch
      %19 = sbr.rel (0) target = $region5
    $region4: #{tpu_custom_call.1} parent=1 // pred_region
      %s21 = ssub.s32 384, 384
      %22 = vsyncadd [#allocation3], %s21
      %s23 = sshll.u32 [#allocation2], 4
      %s24 = int_to_ptr.vmem [resolvable:$true] %s23
      %29 = dma.hbm_to_vmem [thread:$0]  %s0, 384, %s24, [#allocation3], 192, 192, 12
    $region5: #{tpu_custom_call.1} parent=1 // pred_fallthru
      _
    // Predicated region
    $region6: #{tpu_custom_call.1} parent=1 // pred_check
      _
    $region7: #{tpu_custom_call.1} parent=1 // pred_check_branch
      %31 = sbr.rel (0) target = $region9
    $region8: #{tpu_custom_call.1} parent=1 // pred_region
      %s33 = ssub.s32 2496, 2496
      %34 = vsyncadd [#allocation6], %s33
      %s35 = sshll.u32 [#allocation5], 4
      %s36 = int_to_ptr.vmem [resolvable:$true] %s35
      %41 = dma.hbm_to_vmem [thread:$0]  %s1, 2496, %s36, [#allocation6], 64, 64, 4
    $region9: #{tpu_custom_call.1} parent=1 // pred_fallthru
      _
    // Predicated region
    $region10: #{tpu_custom_call.1} parent=1 // pred_check
      _
    $region11: #{tpu_custom_call.1} parent=1 // pred_check_branch
      %43 = sbr.rel (0) target = $region13
    $region12: #{tpu_custom_call.1} parent=1 // pred_region
      _
    $region13: #{tpu_custom_call.1} parent=1 // pred_fallthru
      _
    // Predicated region
    $region14: #{tpu_custom_call.1} parent=1 // pred_check
      _
    $region15: #{tpu_custom_call.1} parent=1 // pred_check_branch
      %45 = sbr.rel (0) target = $region17
    $region16: #{tpu_custom_call.1} parent=1 // pred_region
      %s47 = ssub.s32 1024, 1024
      %48 = vsyncadd [#allocation6], %s47
      %s49 = sshll.u32 [#allocation7], 4
      %s50 = int_to_ptr.vmem [resolvable:$true] %s49
      %55 = dma.hbm_to_vmem [thread:$0]  %s3, 1024, %s50, [#allocation6], 64, 64, 4
    $region17: #{tpu_custom_call.1} parent=1 // pred_fallthru
      _
    // Predicated region
    $region18: #{tpu_custom_call.1} parent=1 // pred_check
      _
    $region19: #{tpu_custom_call.1} parent=1 // pred_check_branch
      %57 = sbr.rel (0) target = $region21
    $region20: #{tpu_custom_call.1} parent=1 // pred_region
      _
    $region21: #{tpu_custom_call.1} parent=1 // pred_fallthru
      _
    // Predicated region
    $region22: #{tpu_custom_call.1} parent=1 // pred_check
      _
    $region23: #{tpu_custom_call.1} parent=1 // pred_check_branch
      %59 = sbr.rel (0) target = $region25
    $region24: #{tpu_custom_call.1} parent=1 // pred_region
      %s61 = ssub.s32 1024, 1024
      %62 = vsyncadd [#allocation9], %s61
      %s63 = sshll.u32 [#allocation8], 4
      %s64 = int_to_ptr.vmem [resolvable:$true] %s63
      %69 = dma.hbm_to_vmem [thread:$0]  %s5, 1024, %s64, [#allocation9], 64, 64, 4
    $region25: #{tpu_custom_call.1} parent=1 // pred_fallthru
      _
    // Predicated region
    $region26: #{tpu_custom_call.1} parent=1 // pred_check
      _
    $region27: #{tpu_custom_call.1} parent=1 // pred_check_branch
      %71 = sbr.rel (0) target = $region29
    $region28: #{tpu_custom_call.1} parent=1 // pred_region
      _
    $region29: #{tpu_custom_call.1} parent=1 // pred_fallthru
      _
    // Predicated region
    $region30: #{tpu_custom_call.1} parent=1 // pred_check
      _
    $region31: #{tpu_custom_call.1} parent=1 // pred_check_branch
      %73 = sbr.rel (0) target = $region33
    $region32: #{tpu_custom_call.1} parent=1 // pred_region
      %s75 = ssub.s32 1024, 1024
      %76 = vsyncadd [#allocation9], %s75
      %s77 = sshll.u32 [#allocation10], 4
      %s78 = int_to_ptr.vmem [resolvable:$true] %s77
      %83 = dma.hbm_to_vmem [thread:$0]  %s7, 1024, %s78, [#allocation9], 64, 64, 4
    $region33: #{tpu_custom_call.1} parent=1 // pred_fallthru
      _
    // Predicated region
    $region34: #{tpu_custom_call.1} parent=1 // pred_check
      _
    $region35: #{tpu_custom_call.1} parent=1 // pred_check_branch
      %85 = sbr.rel (0) target = $region37
    $region36: #{tpu_custom_call.1} parent=1 // pred_region
      _
    $region37: #{tpu_custom_call.1} parent=1 // pred_fallthru
      _
    // Predicated region
    $region38: #{tpu_custom_call.1} parent=1 // pred_check
      _
    $region39: #{tpu_custom_call.1} parent=1 // pred_check_branch
      %87 = sbr.rel (0) target = $region41
    $region40: #{tpu_custom_call.1} parent=1 // pred_region
      %88 = dma.done [#allocation3], 384
    $region41: #{tpu_custom_call.1} parent=1 // pred_fallthru
      _
    // Predicated region
    $region42: #{tpu_custom_call.1} parent=1 // pred_check
      _
    $region43: #{tpu_custom_call.1} parent=1 // pred_check_branch
      %90 = sbr.rel (0) target = $region45
    $region44: #{tpu_custom_call.1} parent=1 // pred_region
      %91 = dma.done [#allocation6], 2496
    $region45: #{tpu_custom_call.1} parent=1 // pred_fallthru
      _
    // Predicated region
    $region46: #{tpu_custom_call.1} parent=1 // pred_check
      _
    $region47: #{tpu_custom_call.1} parent=1 // pred_check_branch
      %93 = sbr.rel (0) target = $region49
    $region48: #{tpu_custom_call.1} parent=1 // pred_region
      %94 = dma.done [#allocation6], 1024
    $region49: #{tpu_custom_call.1} parent=1 // pred_fallthru
      _
    // Predicated region
    $region50: #{tpu_custom_call.1} parent=1 // pred_check
      _
    $region51: #{tpu_custom_call.1} parent=1 // pred_check_branch
      %96 = sbr.rel (0) target = $region53
    $region52: #{tpu_custom_call.1} parent=1 // pred_region
      %97 = dma.done [#allocation9], 1024
    $region53: #{tpu_custom_call.1} parent=1 // pred_fallthru
      _
    // Predicated region
    $region54: #{tpu_custom_call.1} parent=1 // pred_check
      _
    $region55: #{tpu_custom_call.1} parent=1 // pred_check_branch
      %99 = sbr.rel (0) target = $region57
    $region56: #{tpu_custom_call.1} parent=1 // pred_region
      %100 = dma.done [#allocation9], 1024
    $region57: #{tpu_custom_call.1} parent=1 // pred_fallthru
      _
    %v102 = vld [vmem:[#allocation2] sm:$0xff]
    %v103 = vld [vmem:[#allocation2 + $0x8] sm:$0xf]
    %v104 = vld [vmem:[#allocation2 + $0xc] sm:$0xff]
    %v105 = vld [vmem:[#allocation2 + $0x14] sm:$0xf]
    %v106 = vld [vmem:[#allocation5] sm:$0xf]
    %v107 = vld [vmem:[#allocation5 + $0x4] sm:$0xf]
    %v108 = vld [vmem:[#allocation5 + $0x8] sm:$0xf]
    %v109 = vld [vmem:[#allocation5 + $0xc] sm:$0xf]
    %v110 = vld [vmem:[#allocation5 + $0x10] sm:$0xf]
    %v111 = vld [vmem:[#allocation5 + $0x14] sm:$0xf]
    %v112 = vld [vmem:[#allocation5 + $0x18] sm:$0xf]
    %v113 = vld [vmem:[#allocation5 + $0x1c] sm:$0xf]
    %v114 = vld [vmem:[#allocation5 + $0x20] sm:$0xf]
    %v115 = vld [vmem:[#allocation5 + $0x24] sm:$0xf]
    %v116 = vld [vmem:[#allocation5 + $0x28] sm:$0xf]
    %v117 = vld [vmem:[#allocation5 + $0x2c] sm:$0xf]
    %v118 = vld [vmem:[#allocation5 + $0x30] sm:$0xf]
    %v119 = vld [vmem:[#allocation5 + $0x34] sm:$0xf]
    %v120 = vld [vmem:[#allocation5 + $0x38] sm:$0xf]
    %v121 = vld [vmem:[#allocation5 + $0x3c] sm:$0xf]
    %v122 = vld [vmem:[#allocation5 + $0x40] sm:$0xf]
    %v123 = vld [vmem:[#allocation5 + $0x44] sm:$0xf]
    %v124 = vld [vmem:[#allocation5 + $0x48] sm:$0xf]
    %v125 = vld [vmem:[#allocation5 + $0x4c] sm:$0xf]
    %v126 = vld [vmem:[#allocation5 + $0x50] sm:$0xf]
    %v127 = vld [vmem:[#allocation5 + $0x54] sm:$0xf]
    %v128 = vld [vmem:[#allocation5 + $0x58] sm:$0xf]
    %v129 = vld [vmem:[#allocation5 + $0x5c] sm:$0xf]
    %v130 = vld [vmem:[#allocation5 + $0x60] sm:$0xf]
    %v131 = vld [vmem:[#allocation5 + $0x64] sm:$0xf]
    %v132 = vld [vmem:[#allocation5 + $0x68] sm:$0xf]
    %v133 = vld [vmem:[#allocation5 + $0x6c] sm:$0xf]
    %v134 = vld [vmem:[#allocation5 + $0x70] sm:$0xf]
    %v135 = vld [vmem:[#allocation5 + $0x74] sm:$0xf]
    %v136 = vld [vmem:[#allocation5 + $0x78] sm:$0xf]
    %v137 = vld [vmem:[#allocation5 + $0x7c] sm:$0xf]
    %v138 = vld [vmem:[#allocation5 + $0x80] sm:$0xf]
    %v139 = vld [vmem:[#allocation5 + $0x84] sm:$0xf]
    %v140 = vld [vmem:[#allocation5 + $0x88] sm:$0xf]
    %v141 = vld [vmem:[#allocation5 + $0x8c] sm:$0xf]
    %v142 = vld [vmem:[#allocation5 + $0x90] sm:$0xf]
    %v143 = vld [vmem:[#allocation5 + $0x94] sm:$0xf]
    %v144 = vld [vmem:[#allocation5 + $0x98] sm:$0x7]
    %v145 = vld [vmem:[%s2] sm:$0x1]
    %v147 = vlaneseq
    %v148 = vshrl.u32 %v147, 7
    %v149 = vsub.s32 0, %v148
    %v150 = vrot.slane %v145, %v149
    %v156 = vunpack.c.l.b16 %v102
    %v157 = vunpack.c.h.b16 %v102
    %v158 = vunpack.c.l.b16 %v103
    %v159 = vunpack.c.l.b16 %v104
    %v160 = vunpack.c.h.b16 %v104
    %v161 = vunpack.c.l.b16 %v105
    %v162 = vpack.c.b16 %v159, %v156
    %v163 = vpack.c.b16 %v160, %v157
    %v164 = vpack.c.b16 %v161, %v158
    %v206 = vunpack.c.l.b16 %v106
    %v207 = vunpack.c.l.b16 %v107
    %v208 = vunpack.c.l.b16 %v108
    %v209 = vunpack.c.l.b16 %v109
    %v210 = vunpack.c.l.b16 %v110
    %v211 = vunpack.c.l.b16 %v111
    %v212 = vunpack.c.l.b16 %v112
    %v213 = vunpack.c.l.b16 %v113
    %v214 = vunpack.c.l.b16 %v114
    %v215 = vunpack.c.l.b16 %v115
    %v216 = vunpack.c.l.b16 %v116
    %v217 = vunpack.c.l.b16 %v117
    %v218 = vunpack.c.l.b16 %v118
    %v219 = vunpack.c.l.b16 %v119
    %v220 = vunpack.c.l.b16 %v120
    %v221 = vunpack.c.l.b16 %v121
    %v222 = vunpack.c.l.b16 %v122
    %v223 = vunpack.c.l.b16 %v123
    %v224 = vunpack.c.l.b16 %v124
    %v225 = vunpack.c.l.b16 %v125
    %v226 = vunpack.c.l.b16 %v126
    %v227 = vunpack.c.l.b16 %v127
    %v228 = vunpack.c.l.b16 %v128
    %v229 = vunpack.c.l.b16 %v129
    %v230 = vunpack.c.l.b16 %v130
    %v231 = vunpack.c.l.b16 %v131
    %v232 = vunpack.c.l.b16 %v132
    %v233 = vunpack.c.l.b16 %v133
    %v234 = vunpack.c.l.b16 %v134
    %v235 = vunpack.c.l.b16 %v135
    %v236 = vunpack.c.l.b16 %v136
    %v237 = vunpack.c.l.b16 %v137
    %v238 = vunpack.c.l.b16 %v138
    %v239 = vunpack.c.l.b16 %v139
    %v240 = vunpack.c.l.b16 %v140
    %v241 = vunpack.c.l.b16 %v141
    %v242 = vunpack.c.l.b16 %v142
    %v243 = vunpack.c.l.b16 %v143
    %v244 = vunpack.c.l.b16 %v144
    %v245 = vpack.c.b16 %v207, %v206
    %v246 = vpack.c.b16 %v209, %v208
    %v247 = vpack.c.b16 %v211, %v210
    %v248 = vpack.c.b16 %v213, %v212
    %v249 = vpack.c.b16 %v215, %v214
    %v250 = vpack.c.b16 %v217, %v216
    %v251 = vpack.c.b16 %v219, %v218
    %v252 = vpack.c.b16 %v221, %v220
    %v253 = vpack.c.b16 %v223, %v222
    %v254 = vpack.c.b16 %v225, %v224
    %v255 = vpack.c.b16 %v227, %v226
    %v256 = vpack.c.b16 %v229, %v228
    %v257 = vpack.c.b16 %v231, %v230
    %v258 = vpack.c.b16 %v233, %v232
    %v259 = vpack.c.b16 %v235, %v234
    %v260 = vpack.c.b16 %v237, %v236
    %v261 = vpack.c.b16 %v239, %v238
    %v262 = vpack.c.b16 %v241, %v240
    %v263 = vpack.c.b16 %v243, %v242
    %v264 = vpack.c.b16 %v244, %v244
    %vm284 = vcmask 441344
    %v286 = vsel %vm284, %v164, 0
    %vm288 = vcmask 1042432
    %v290 = vsel %vm288, %v264, 0
    %292 = vmatprep.subr.bf16.mxu0 0
    %293 = vmatpush1.bf16.msra.mxu0 %v245
    %294 = vmatprep.subr.bf16.mxu0 0
    %295 = vmatpush1.bf16.msra.mxu0 %v246
    %296 = vmatprep.subr.bf16.mxu0 0
    %297 = vmatpush1.bf16.msra.mxu0 %v247
    %298 = vmatprep.subr.bf16.mxu0 0
    %299 = vmatpush1.bf16.msra.mxu0 %v248
    %300 = vmatprep.subr.bf16.mxu0 0
    %301 = vmatpush1.bf16.msra.mxu0 %v249
    %302 = vmatprep.subr.bf16.mxu0 0
    %303 = vmatpush1.bf16.msra.mxu0 %v250
    %304 = vmatprep.subr.bf16.mxu0 0
    %305 = vmatpush1.bf16.msra.mxu0 %v251
    %306 = vmatprep.subr.bf16.mxu0 0
    %307 = vmatpush1.bf16.msra.mxu0 %v252
    %308 = vmatprep.subr.bf16.mxu0 0
    %309 = vmatpush1.bf16.msra.mxu0 %v253
    %310 = vmatprep.subr.bf16.mxu0 0
    %311 = vmatpush1.bf16.msra.mxu0 %v254
    %312 = vmatprep.subr.bf16.mxu0 0
    %313 = vmatpush1.bf16.msra.mxu0 %v255
    %314 = vmatprep.subr.bf16.mxu0 0
    %315 = vmatpush1.bf16.msra.mxu0 %v256
    %316 = vmatprep.subr.bf16.mxu0 0
    %317 = vmatpush1.bf16.msra.mxu0 %v257
    %318 = vmatprep.subr.bf16.mxu0 0
    %319 = vmatpush1.bf16.msra.mxu0 %v258
    %320 = vmatprep.subr.bf16.mxu0 0
    %321 = vmatpush1.bf16.msra.mxu0 %v259
    %322 = vmatprep.subr.bf16.mxu0 0
    %323 = vmatpush1.bf16.msra.mxu0 %v260
    %324 = vmatprep.mubr.bf16.mxu0 %v163
    %325 = vmatmul.mubr.bf16.gmra.mrb[0].mxu0 %v162
    %v326 = vpop.f32.mrb[0].mxu0
    %v327 = vadd.f32 %v150, %v326
    %v328 = vpop.f32.mrb[0].mxu0
    %v329 = vpop.f32.mrb[0].mxu0
    %v330 = vadd.f32 %v150, %v329
    %v331 = vpop.f32.mrb[0].mxu0
    %332 = vdwg.mxu0
    %333 = vmatprep.subr.bf16.mxu0 0
    %334 = vmatpush1.bf16.msra.mxu0 %v261
    %335 = vmatprep.subr.bf16.mxu0 0
    %336 = vmatpush1.bf16.msra.mxu0 %v262
    %337 = vmatprep.subr.bf16.mxu0 0
    %338 = vmatpush1.bf16.msra.mxu0 %v263
    %339 = vmatprep.subr.bf16.mxu0 0
    %340 = vmatpush1.bf16.msra.mxu0 %v290
    %341 = vmatprep.subr.bf16.mxu0 0
    %342 = vmatpush1.bf16.msra.mxu0 0
    %343 = vmatprep.subr.bf16.mxu0 0
    %344 = vmatpush1.bf16.msra.mxu0 0
    %345 = vmatprep.subr.bf16.mxu0 0
    %346 = vmatpush1.bf16.msra.mxu0 0
    %347 = vmatprep.subr.bf16.mxu0 0
    %348 = vmatpush1.bf16.msra.mxu0 0
    %349 = vmatprep.subr.bf16.mxu0 0
    %350 = vmatpush1.bf16.msra.mxu0 0
    %351 = vmatprep.subr.bf16.mxu0 0
    %352 = vmatpush1.bf16.msra.mxu0 0
    %353 = vmatprep.subr.bf16.mxu0 0
    %354 = vmatpush1.bf16.msra.mxu0 0
    %355 = vmatprep.subr.bf16.mxu0 0
    %356 = vmatpush1.bf16.msra.mxu0 0
    %357 = vmatprep.subr.bf16.mxu0 0
    %358 = vmatpush1.bf16.msra.mxu0 0
    %359 = vmatprep.subr.bf16.mxu0 0
    %360 = vmatpush1.bf16.msra.mxu0 0
    %361 = vmatprep.subr.bf16.mxu0 0
    %362 = vmatpush1.bf16.msra.mxu0 0
    %363 = vmatprep.subr.bf16.mxu0 0
    %364 = vmatpush1.bf16.msra.mxu0 0
    %365 = vmatprep.mubr.bf16.mxu0 0
    %366 = vmatmul.mubr.bf16.gmra.mrb[0].mxu0 %v286
    %v367 = vpop.f32.mrb[0].mxu0
    %v368 = vadd.f32 %v327, %v367
    %v369 = vpop.f32.mrb[0].mxu0
    %v370 = vpop.f32.mrb[0].mxu0
    %v371 = vadd.f32 %v330, %v370
    %v372 = vpop.f32.mrb[0].mxu0
    %373 = vdwg.mxu0
    %v374 = vmax.f32 %v368, 0.0
    %v375 = vmax.f32 %v371, 0.0
    %v376 = vpack.c.bf16 %v375, %v374
    %v377 = vld [vmem:[#allocation7] sm:$0xf]
    %v378 = vld [vmem:[#allocation7 + $0x4] sm:$0xf]
    %v379 = vld [vmem:[#allocation7 + $0x8] sm:$0xf]
    %v380 = vld [vmem:[#allocation7 + $0xc] sm:$0xf]
    %v381 = vld [vmem:[#allocation7 + $0x10] sm:$0xf]
    %v382 = vld [vmem:[#allocation7 + $0x14] sm:$0xf]
    %v383 = vld [vmem:[#allocation7 + $0x18] sm:$0xf]
    %v384 = vld [vmem:[#allocation7 + $0x1c] sm:$0xf]
    %v385 = vld [vmem:[#allocation7 + $0x20] sm:$0xf]
    %v386 = vld [vmem:[#allocation7 + $0x24] sm:$0xf]
    %v387 = vld [vmem:[#allocation7 + $0x28] sm:$0xf]
    %v388 = vld [vmem:[#allocation7 + $0x2c] sm:$0xf]
    %v389 = vld [vmem:[#allocation7 + $0x30] sm:$0xf]
    %v390 = vld [vmem:[#allocation7 + $0x34] sm:$0xf]
    %v391 = vld [vmem:[#allocation7 + $0x38] sm:$0xf]
    %v392 = vld [vmem:[#allocation7 + $0x3c] sm:$0xf]
    %v393 = vld [vmem:[%s4] sm:$0x1]
    %v395 = vlaneseq
    %v396 = vshrl.u32 %v395, 7
    %v397 = vsub.s32 0, %v396
    %v398 = vrot.slane %v393, %v397
    %v416 = vunpack.c.l.b16 %v377
    %v417 = vunpack.c.l.b16 %v378
    %v418 = vunpack.c.l.b16 %v379
    %v419 = vunpack.c.l.b16 %v380
    %v420 = vunpack.c.l.b16 %v381
    %v421 = vunpack.c.l.b16 %v382
    %v422 = vunpack.c.l.b16 %v383
    %v423 = vunpack.c.l.b16 %v384
    %v424 = vunpack.c.l.b16 %v385
    %v425 = vunpack.c.l.b16 %v386
    %v426 = vunpack.c.l.b16 %v387
    %v427 = vunpack.c.l.b16 %v388
    %v428 = vunpack.c.l.b16 %v389
    %v429 = vunpack.c.l.b16 %v390
    %v430 = vunpack.c.l.b16 %v391
    %v431 = vunpack.c.l.b16 %v392
    %v432 = vpack.c.b16 %v417, %v416
    %v433 = vpack.c.b16 %v419, %v418
    %v434 = vpack.c.b16 %v421, %v420
    %v435 = vpack.c.b16 %v423, %v422
    %v436 = vpack.c.b16 %v425, %v424
    %v437 = vpack.c.b16 %v427, %v426
    %v438 = vpack.c.b16 %v429, %v428
    %v439 = vpack.c.b16 %v431, %v430
    %448 = vmatprep.subr.bf16.mxu0 0
    %449 = vmatpush1.bf16.msra.mxu0 %v432
    %450 = vmatprep.subr.bf16.mxu0 0
    %451 = vmatpush1.bf16.msra.mxu0 %v433
    %452 = vmatprep.subr.bf16.mxu0 0
    %453 = vmatpush1.bf16.msra.mxu0 %v434
    %454 = vmatprep.subr.bf16.mxu0 0
    %455 = vmatpush1.bf16.msra.mxu0 %v435
    %456 = vmatprep.subr.bf16.mxu0 0
    %457 = vmatpush1.bf16.msra.mxu0 %v436
    %458 = vmatprep.subr.bf16.mxu0 0
    %459 = vmatpush1.bf16.msra.mxu0 %v437
    %460 = vmatprep.subr.bf16.mxu0 0
    %461 = vmatpush1.bf16.msra.mxu0 %v438
    %462 = vmatprep.subr.bf16.mxu0 0
    %463 = vmatpush1.bf16.msra.mxu0 %v439
    %464 = vmatprep.subr.bf16.mxu0 0
    %465 = vmatpush1.bf16.msra.mxu0 0
    %466 = vmatprep.subr.bf16.mxu0 0
    %467 = vmatpush1.bf16.msra.mxu0 0
    %468 = vmatprep.subr.bf16.mxu0 0
    %469 = vmatpush1.bf16.msra.mxu0 0
    %470 = vmatprep.subr.bf16.mxu0 0
    %471 = vmatpush1.bf16.msra.mxu0 0
    %472 = vmatprep.subr.bf16.mxu0 0
    %473 = vmatpush1.bf16.msra.mxu0 0
    %474 = vmatprep.subr.bf16.mxu0 0
    %475 = vmatpush1.bf16.msra.mxu0 0
    %476 = vmatprep.subr.bf16.mxu0 0
    %477 = vmatpush1.bf16.msra.mxu0 0
    %478 = vmatprep.subr.bf16.mxu0 0
    %479 = vmatpush1.bf16.msra.mxu0 0
    %480 = vmatprep.mubr.bf16.mxu0 0
    %481 = vmatmul.mubr.bf16.gmra.mrb[0].mxu0 %v376
    %v482 = vpop.f32.mrb[0].mxu0
    %v483 = vadd.f32 %v398, %v482
    %v484 = vpop.f32.mrb[0].mxu0
    %v485 = vpop.f32.mrb[0].mxu0
    %v486 = vadd.f32 %v398, %v485
    %v487 = vpop.f32.mrb[0].mxu0
    %488 = vdwg.mxu0
    %v489 = vmax.f32 %v483, 0.0
    %v490 = vmax.f32 %v486, 0.0
    %v491 = vpack.c.bf16 %v490, %v489
    %v492 = vld [vmem:[#allocation8] sm:$0xf]
    %v493 = vld [vmem:[#allocation8 + $0x4] sm:$0xf]
    %v494 = vld [vmem:[#allocation8 + $0x8] sm:$0xf]
    %v495 = vld [vmem:[#allocation8 + $0xc] sm:$0xf]
    %v496 = vld [vmem:[#allocation8 + $0x10] sm:$0xf]
    %v497 = vld [vmem:[#allocation8 + $0x14] sm:$0xf]
    %v498 = vld [vmem:[#allocation8 + $0x18] sm:$0xf]
    %v499 = vld [vmem:[#allocation8 + $0x1c] sm:$0xf]
    %v500 = vld [vmem:[#allocation8 + $0x20] sm:$0xf]
    %v501 = vld [vmem:[#allocation8 + $0x24] sm:$0xf]
    %v502 = vld [vmem:[#allocation8 + $0x28] sm:$0xf]
    %v503 = vld [vmem:[#allocation8 + $0x2c] sm:$0xf]
    %v504 = vld [vmem:[#allocation8 + $0x30] sm:$0xf]
    %v505 = vld [vmem:[#allocation8 + $0x34] sm:$0xf]
    %v506 = vld [vmem:[#allocation8 + $0x38] sm:$0xf]
    %v507 = vld [vmem:[#allocation8 + $0x3c] sm:$0xf]
    %v508 = vld [vmem:[%s6] sm:$0x1]
    %v510 = vlaneseq
    %v511 = vshrl.u32 %v510, 7
    %v512 = vsub.s32 0, %v511
    %v513 = vrot.slane %v508, %v512
    %v531 = vunpack.c.l.b16 %v492
    %v532 = vunpack.c.l.b16 %v493
    %v533 = vunpack.c.l.b16 %v494
    %v534 = vunpack.c.l.b16 %v495
    %v535 = vunpack.c.l.b16 %v496
    %v536 = vunpack.c.l.b16 %v497
    %v537 = vunpack.c.l.b16 %v498
    %v538 = vunpack.c.l.b16 %v499
    %v539 = vunpack.c.l.b16 %v500
    %v540 = vunpack.c.l.b16 %v501
    %v541 = vunpack.c.l.b16 %v502
    %v542 = vunpack.c.l.b16 %v503
    %v543 = vunpack.c.l.b16 %v504
    %v544 = vunpack.c.l.b16 %v505
    %v545 = vunpack.c.l.b16 %v506
    %v546 = vunpack.c.l.b16 %v507
    %v547 = vpack.c.b16 %v532, %v531
    %v548 = vpack.c.b16 %v534, %v533
    %v549 = vpack.c.b16 %v536, %v535
    %v550 = vpack.c.b16 %v538, %v537
    %v551 = vpack.c.b16 %v540, %v539
    %v552 = vpack.c.b16 %v542, %v541
    %v553 = vpack.c.b16 %v544, %v543
    %v554 = vpack.c.b16 %v546, %v545
    %563 = vmatprep.subr.bf16.mxu0 0
    %564 = vmatpush1.bf16.msra.mxu0 %v547
    %565 = vmatprep.subr.bf16.mxu0 0
    %566 = vmatpush1.bf16.msra.mxu0 %v548
    %567 = vmatprep.subr.bf16.mxu0 0
    %568 = vmatpush1.bf16.msra.mxu0 %v549
    %569 = vmatprep.subr.bf16.mxu0 0
    %570 = vmatpush1.bf16.msra.mxu0 %v550
    %571 = vmatprep.subr.bf16.mxu0 0
    %572 = vmatpush1.bf16.msra.mxu0 %v551
    %573 = vmatprep.subr.bf16.mxu0 0
    %574 = vmatpush1.bf16.msra.mxu0 %v552
    %575 = vmatprep.subr.bf16.mxu0 0
    %576 = vmatpush1.bf16.msra.mxu0 %v553
    %577 = vmatprep.subr.bf16.mxu0 0
    %578 = vmatpush1.bf16.msra.mxu0 %v554
    %579 = vmatprep.subr.bf16.mxu0 0
    %580 = vmatpush1.bf16.msra.mxu0 0
    %581 = vmatprep.subr.bf16.mxu0 0
    %582 = vmatpush1.bf16.msra.mxu0 0
    %583 = vmatprep.subr.bf16.mxu0 0
    %584 = vmatpush1.bf16.msra.mxu0 0
    %585 = vmatprep.subr.bf16.mxu0 0
    %586 = vmatpush1.bf16.msra.mxu0 0
    %587 = vmatprep.subr.bf16.mxu0 0
    %588 = vmatpush1.bf16.msra.mxu0 0
    %589 = vmatprep.subr.bf16.mxu0 0
    %590 = vmatpush1.bf16.msra.mxu0 0
    %591 = vmatprep.subr.bf16.mxu0 0
    %592 = vmatpush1.bf16.msra.mxu0 0
    %593 = vmatprep.subr.bf16.mxu0 0
    %594 = vmatpush1.bf16.msra.mxu0 0
    %595 = vmatprep.mubr.bf16.mxu0 0
    %596 = vmatmul.mubr.bf16.gmra.mrb[0].mxu0 %v491
    %v597 = vpop.f32.mrb[0].mxu0
    %v598 = vadd.f32 %v513, %v597
    %v599 = vpop.f32.mrb[0].mxu0
    %v600 = vpop.f32.mrb[0].mxu0
    %v601 = vadd.f32 %v513, %v600
    %v602 = vpop.f32.mrb[0].mxu0
    %603 = vdwg.mxu0
    %v604 = vmax.f32 %v598, 0.0
    %v605 = vmax.f32 %v601, 0.0
    %v606 = vpack.c.bf16 %v605, %v604
    %v607 = vld [vmem:[#allocation10] sm:$0xf]
    %v608 = vld [vmem:[#allocation10 + $0x4] sm:$0xf]
    %v609 = vld [vmem:[#allocation10 + $0x8] sm:$0xf]
    %v610 = vld [vmem:[#allocation10 + $0xc] sm:$0xf]
    %v611 = vld [vmem:[#allocation10 + $0x10] sm:$0xf]
    %v612 = vld [vmem:[#allocation10 + $0x14] sm:$0xf]
    %v613 = vld [vmem:[#allocation10 + $0x18] sm:$0xf]
    %v614 = vld [vmem:[#allocation10 + $0x1c] sm:$0xf]
    %v615 = vld [vmem:[#allocation10 + $0x20] sm:$0xf]
    %v616 = vld [vmem:[#allocation10 + $0x24] sm:$0xf]
    %v617 = vld [vmem:[#allocation10 + $0x28] sm:$0xf]
    %v618 = vld [vmem:[#allocation10 + $0x2c] sm:$0xf]
    %v619 = vld [vmem:[#allocation10 + $0x30] sm:$0xf]
    %v620 = vld [vmem:[#allocation10 + $0x34] sm:$0xf]
    %v621 = vld [vmem:[#allocation10 + $0x38] sm:$0xf]
    %v622 = vld [vmem:[#allocation10 + $0x3c] sm:$0xf]
    %v623 = vld [vmem:[%s8] sm:$0x1]
    %v625 = vlaneseq
    %v626 = vshrl.u32 %v625, 7
    %v627 = vsub.s32 0, %v626
    %v628 = vrot.slane %v623, %v627
    %v646 = vunpack.c.l.b16 %v607
    %v647 = vunpack.c.l.b16 %v608
    %v648 = vunpack.c.l.b16 %v609
    %v649 = vunpack.c.l.b16 %v610
    %v650 = vunpack.c.l.b16 %v611
    %v651 = vunpack.c.l.b16 %v612
    %v652 = vunpack.c.l.b16 %v613
    %v653 = vunpack.c.l.b16 %v614
    %v654 = vunpack.c.l.b16 %v615
    %v655 = vunpack.c.l.b16 %v616
    %v656 = vunpack.c.l.b16 %v617
    %v657 = vunpack.c.l.b16 %v618
    %v658 = vunpack.c.l.b16 %v619
    %v659 = vunpack.c.l.b16 %v620
    %v660 = vunpack.c.l.b16 %v621
    %v661 = vunpack.c.l.b16 %v622
    %v662 = vpack.c.b16 %v647, %v646
    %v663 = vpack.c.b16 %v649, %v648
    %v664 = vpack.c.b16 %v651, %v650
    %v665 = vpack.c.b16 %v653, %v652
    %v666 = vpack.c.b16 %v655, %v654
    %v667 = vpack.c.b16 %v657, %v656
    %v668 = vpack.c.b16 %v659, %v658
    %v669 = vpack.c.b16 %v661, %v660
    %678 = vmatprep.subr.bf16.mxu0 0
    %679 = vmatpush1.bf16.msra.mxu0 %v662
    %680 = vmatprep.subr.bf16.mxu0 0
    %681 = vmatpush1.bf16.msra.mxu0 %v663
    %682 = vmatprep.subr.bf16.mxu0 0
    %683 = vmatpush1.bf16.msra.mxu0 %v664
    %684 = vmatprep.subr.bf16.mxu0 0
    %685 = vmatpush1.bf16.msra.mxu0 %v665
    %686 = vmatprep.subr.bf16.mxu0 0
    %687 = vmatpush1.bf16.msra.mxu0 %v666
    %688 = vmatprep.subr.bf16.mxu0 0
    %689 = vmatpush1.bf16.msra.mxu0 %v667
    %690 = vmatprep.subr.bf16.mxu0 0
    %691 = vmatpush1.bf16.msra.mxu0 %v668
    %692 = vmatprep.subr.bf16.mxu0 0
    %693 = vmatpush1.bf16.msra.mxu0 %v669
    %694 = vmatprep.subr.bf16.mxu0 0
    %695 = vmatpush1.bf16.msra.mxu0 0
    %696 = vmatprep.subr.bf16.mxu0 0
    %697 = vmatpush1.bf16.msra.mxu0 0
    %698 = vmatprep.subr.bf16.mxu0 0
    %699 = vmatpush1.bf16.msra.mxu0 0
    %700 = vmatprep.subr.bf16.mxu0 0
    %701 = vmatpush1.bf16.msra.mxu0 0
    %702 = vmatprep.subr.bf16.mxu0 0
    %703 = vmatpush1.bf16.msra.mxu0 0
    %704 = vmatprep.subr.bf16.mxu0 0
    %705 = vmatpush1.bf16.msra.mxu0 0
    %706 = vmatprep.subr.bf16.mxu0 0
    %707 = vmatpush1.bf16.msra.mxu0 0
    %708 = vmatprep.subr.bf16.mxu0 0
    %709 = vmatpush1.bf16.msra.mxu0 0
    %710 = vmatprep.mubr.bf16.mxu0 0
    %711 = vmatmul.mubr.bf16.gmra.mrb[0].mxu0 %v606
    %v712 = vpop.f32.mrb[0].mxu0
    %v713 = vadd.f32 %v628, %v712
    %v714 = vpop.f32.mrb[0].mxu0
    %v715 = vpop.f32.mrb[0].mxu0
    %v716 = vadd.f32 %v628, %v715
    %v717 = vpop.f32.mrb[0].mxu0
    %718 = vdwg.mxu0
    %v719 = vpack.c.bf16 %v716, %v713
    %v721 = vunpack.c.l.b16 %v719
    %v722 = vunpack.c.h.b16 %v719
    %v723 = vpack.c.b16 %v721, %v721
    %v724 = vpack.c.b16 %v722, %v722
    %727 = vst [vmem:[#allocation11] sm:$0xf] %v723
    %728 = vst [vmem:[#allocation11 + $0x4] sm:$0xf] %v724
    // Predicated region
    $region58: #{tpu_custom_call.1} parent=1 // pred_check
      _
    $region59: #{tpu_custom_call.1} parent=1 // pred_check_branch
      %730 = sbr.rel (0) target = $region61
    $region60: #{tpu_custom_call.1} parent=1 // pred_region
      %s732 = ssub.s32 128, 128
      %733 = vsyncadd [#allocation4], %s732
      %s734 = sshll.u32 [#allocation11], 4
      %s735 = int_to_ptr.vmem [resolvable:$true] %s734
      %740 = dma.vmem_to_hbm [thread:$0]  %s735, 128, %s9, [#allocation4], 64, 64, 4
    $region61: #{tpu_custom_call.1} parent=1 // pred_fallthru
      _
    // Predicated region
    $region62: #{tpu_custom_call.1} parent=1 // pred_check
      _
    $region63: #{tpu_custom_call.1} parent=1 // pred_check_branch
      %742 = sbr.rel (0) target = $region65
    $region64: #{tpu_custom_call.1} parent=1 // pred_region
      %743 = dma.done [#allocation4], 128
    $region65: #{tpu_custom_call.1} parent=1 // pred_fallthru
      _
    %744 = vsyncpa [#allocation3], 1
    %745 = vsyncpa [#allocation6], 1
    %746 = vsyncpa [#allocation9], 1
    %747 = vsyncpa [#allocation4], 1

</llo_original>
